<compile_context>
chip_gen: v7x
topology: tpu7x:2x2x1
jax: 0.10.0
libtpu: 0.0.40
codegen_flags: <defaults>
</compile_context>

<pallas_src>
import jax
import jax.numpy as jnp
from jax.experimental import pallas as pl
from jax.experimental.pallas import tpu as pltpu


def _copy_kernel(x_ref, o_ref):
    # Elementwise identity on the current (tile_rows, lane) tile.
    o_ref[...] = x_ref[...]


def _pick_2d_layout(total_elems: int, itemsize: int):
    """Choose (rows, lane_width, tile_rows) for a lane-dense 2D copy.

    Returns None if total_elems is not a multiple of 128 (caller falls back
    to a single whole-array block).
    """
    if total_elems % 128 != 0:
        return None
    # Lane width: largest multiple of 128 dividing the total, capped at 2048.
    lane = 128
    while lane * 2 <= 2048 and total_elems % (lane * 2) == 0:
        lane *= 2
    rows = total_elems // lane
    # ~1 MiB per buffer per tile: safe for v5e's 16 MiB scoped VMEM with the
    # in/out pipeline double-buffered, and at HBM roofline on v6e/v7x.
    target_rows = max(8, (1 << 20) // (lane * itemsize))
    if rows <= target_rows or rows % 8 != 0:
        tile_rows = rows  # single tile; full-extent block is always legal
    else:
        tile_rows = 8
        while tile_rows * 2 <= target_rows and rows % (tile_rows * 2) == 0:
            tile_rows *= 2
    return rows, lane, tile_rows


def feature_map_forward(x: jnp.ndarray,
                        input_dim: int = None,
                        temp: float = None,
                        head_dim_idx: int = -1,
                        eps: float = 1e-12,
                        use_kernel: bool = False) -> jnp.ndarray:
    """Pallas version of FeatureMap.forward: identity on x.

    x: (batch, n_heads, seq_len, head_dim)

    Default path returns x with no kernel (the forward is a pure identity, so
    a kernel would only spend 2x HBM bandwidth). `use_kernel=True` runs an
    optimally tiled Pallas copy kernel for API parity / testing.
    """
    assert x.ndim == 4, "expected (batch, n_heads, seq_len, head_dim)"
    if not use_kernel:
        return x

    orig_shape = x.shape
    layout = _pick_2d_layout(x.size, x.dtype.itemsize)

    if layout is None:
        # Rare fallback (total not a multiple of 128): single whole-array
        # block — correct, but with masked partial stores on the lane axis.
        return pl.pallas_call(
            _copy_kernel,
            out_shape=jax.ShapeDtypeStruct(x.shape, x.dtype),
        )(x)

    rows, lane, tile_rows = layout
    x2d = x.reshape(rows, lane)
    out2d = pl.pallas_call(
        _copy_kernel,
        out_shape=jax.ShapeDtypeStruct((rows, lane), x.dtype),
        grid=(rows // tile_rows,),
        in_specs=[pl.BlockSpec((tile_rows, lane), lambda i: (i, 0))],
        out_specs=pl.BlockSpec((tile_rows, lane), lambda i: (i, 0)),
        compiler_params=pltpu.CompilerParams(
            dimension_semantics=("parallel",)),
    )(x2d)
    return out2d.reshape(orig_shape)


if __name__ == "__main__":
    key = jax.random.PRNGKey(0)
    batch, n_heads, seq_len, head_dim = 2, 4, 16, 32
    x = jax.random.normal(key, (batch, n_heads, seq_len, head_dim),
                          dtype=jnp.float32)

    # Module constructor args (unused in forward, kept for fidelity).
    input_dim = head_dim
    temp = 1.0
    eps = 1e-12

    # Fast path (what production code should use): identity, returns x as-is.
    y_fast = feature_map_forward(x, input_dim=input_dim, temp=temp, eps=eps)
    assert y_fast is x

    # Kernel path (API parity): lane-dense tiled copy through VMEM.
    y_kernel = feature_map_forward(x, input_dim=input_dim, temp=temp, eps=eps,
                                   use_kernel=True)
    y_kernel = jax.block_until_ready(y_kernel)

    # Reference check: identity.
    assert y_kernel.shape == x.shape and y_kernel.dtype == x.dtype
    assert bool(jnp.all(y_kernel == x))
    print("KERNEL_OK")
</pallas_src>

<mosaic_0001>
module attributes {stable_mosaic.version = 11 : i64} {
  func.func @_copy_kernel(%arg0: i32, %arg1: memref<2x2048xf32, #tpu.memory_space<vmem>>, %arg2: memref<2x2048xf32, #tpu.memory_space<vmem>>) attributes {dimension_semantics = [#tpu.dimension_semantics<parallel>], iteration_bounds = array<i64: 1>, scalar_prefetch = 0 : i64, scratch_operands = 0 : i64, tpu.core_type = #tpu.core_type<tc>, window_params = [{transform_indices = @transform_0, window_bounds = array<i64: 2, 2048>}, {transform_indices = @transform_1, window_bounds = array<i64: 2, 2048>}]} {
    %c0 = arith.constant 0 : index
    %c0_0 = arith.constant 0 : index
    %0 = vector.load %arg1[%c0, %c0_0] : memref<2x2048xf32, #tpu.memory_space<vmem>>, vector<2x2048xf32>
    %c0_1 = arith.constant 0 : index
    %c0_2 = arith.constant 0 : index
    %1 = vector.load %arg2[%c0_1, %c0_2] : memref<2x2048xf32, #tpu.memory_space<vmem>>, vector<2x2048xf32>
    tpu.vector_store %arg2[%c0_1, %c0_2], %0 {strides = array<i32>} : memref<2x2048xf32, #tpu.memory_space<vmem>>, vector<2x2048xf32>,
    return
  }
  func.func @transform_0(%arg0: i32) -> (i32, i32) {
    %c0_i32 = arith.constant 0 : i32
    %c0_i32_0 = arith.constant 0 : i32
    return %arg0, %c0_i32 : i32, i32
  }
  func.func @transform_1(%arg0: i32) -> (i32, i32) {
    %c0_i32 = arith.constant 0 : i32
    %c0_i32_0 = arith.constant 0 : i32
    return %arg0, %c0_i32 : i32, i32
  }
}

</mosaic_0001>

<llo_original>
// kernel: tpu_custom_call.1
$region0: #{tpu_custom_call.1}
  #allocation0 [shape = 'u32[]', space=smem, size = 0x4, offset = 0x4, fixed_abs, tag = 'smem constant byte address 0x4 - core index']
  #allocation1 [shape = 'u32[144,128]{1,0:T(1,128)}', space=vmem, size = 0x12000, scoped, tag = 'internal scratch']
  %s0 = inlined_call_operand.hbm [shape: f32[2,2048], index: 0, kind: input, shape index: {}]
  %s1 = inlined_call_operand.hbm [shape: f32[2,2048], index: 1, kind: output, shape index: {}]
  %s2 = sld [smem:[#allocation0]]
  $region18: #{tpu_custom_call.1} parent=0
    _
  %s4 = ssub.s32 1, %s2
  %s5 = scalar_select 0, %s4, %s2
  $region1: #{tpu_custom_call.1} parent=0
    #allocation2 [shape = 'u8[16384]{0}', space=vmem, size = 0x4000, scoped, tag = 'input window, operand 0, single buffered']
    #allocation3 [shape = 's32[1]{0}', space=sflag, size = 0x4, scoped, tag = 'scoped memory for tpu_custom_call.1']
    #allocation4 [shape = 's32[1]{0}', space=sflag, size = 0x4, scoped, tag = 'scoped memory for tpu_custom_call.1']
    #allocation5 [shape = 'u8[16384]{0}', space=vmem, size = 0x4000, scoped, tag = 'output window, operand 0, single buffered']
    %6 = vsyncpa [#allocation3], 0
    %7 = vsyncpa [#allocation4], 0
    // Predicated region
    $region2: #{tpu_custom_call.1} parent=1 // pred_check
      _
    $region3: #{tpu_custom_call.1} parent=1 // pred_check_branch
      %9 = sbr.rel (0) target = $region5
    $region4: #{tpu_custom_call.1} parent=1 // pred_region
      %s11 = ssub.s32 512, 512
      %12 = vsyncadd [#allocation3], %s11
      %s14 = sshll.u32 [#allocation2], 4
      %s15 = int_to_ptr.vmem [resolvable:$true] %s14
      %17 = dma.hbm_to_vmem [thread:$0]  %s0, 512, %s15, [#allocation3]
    $region5: #{tpu_custom_call.1} parent=1 // pred_fallthru
      _
    // Predicated region
    $region6: #{tpu_custom_call.1} parent=1 // pred_check
      _
    $region7: #{tpu_custom_call.1} parent=1 // pred_check_branch
      %19 = sbr.rel (0) target = $region9
    $region8: #{tpu_custom_call.1} parent=1 // pred_region
      %20 = dma.done [#allocation3], 512
    $region9: #{tpu_custom_call.1} parent=1 // pred_fallthru
      _
    %v21 = vld [vmem:[#allocation2] sm:$0xff]
    %v22 = vld [vmem:[#allocation2 + $0x8] sm:$0xff]
    %v23 = vld [vmem:[#allocation2 + $0x10] sm:$0xff]
    %v24 = vld [vmem:[#allocation2 + $0x18] sm:$0xff]
    %25 = vst [vmem:[#allocation5] sm:$0xff] %v21
    %26 = vst [vmem:[#allocation5 + $0x8] sm:$0xff] %v22
    %27 = vst [vmem:[#allocation5 + $0x10] sm:$0xff] %v23
    %28 = vst [vmem:[#allocation5 + $0x18] sm:$0xff] %v24
    // Predicated region
    $region10: #{tpu_custom_call.1} parent=1 // pred_check
      _
    $region11: #{tpu_custom_call.1} parent=1 // pred_check_branch
      %30 = sbr.rel (0) target = $region13
    $region12: #{tpu_custom_call.1} parent=1 // pred_region
      %s32 = ssub.s32 512, 512
      %33 = vsyncadd [#allocation4], %s32
      %s35 = sshll.u32 [#allocation5], 4
      %s36 = int_to_ptr.vmem [resolvable:$true] %s35
      %38 = dma.vmem_to_hbm [thread:$0]  %s36, 512, %s1, [#allocation4]
    $region13: #{tpu_custom_call.1} parent=1 // pred_fallthru
      _
    // Predicated region
    $region14: #{tpu_custom_call.1} parent=1 // pred_check
      _
    $region15: #{tpu_custom_call.1} parent=1 // pred_check_branch
      %40 = sbr.rel (0) target = $region17
    $region16: #{tpu_custom_call.1} parent=1 // pred_region
      %41 = dma.done [#allocation4], 512
    $region17: #{tpu_custom_call.1} parent=1 // pred_fallthru
      _
    %42 = vsyncpa [#allocation3], 1
    %43 = vsyncpa [#allocation4], 1

</llo_original>
